<compile_context>
chip_gen: v7x
topology: tpu7x:2x2x1
jax: 0.10.0
libtpu: 0.0.40
codegen_flags: <defaults>
</compile_context>

<pallas_src>
import jax
import jax.numpy as jnp
from jax.experimental import pallas as pl
from jax.experimental.pallas import tpu as pltpu

# norse.torch.LIFParameters defaults
DT = 1e-3
TAU_SYN_INV = 200.0
TAU_MEM_INV = 100.0
V_LEAK = 0.0
V_TH = 1.0
V_RESET = 0.0

IN_DIM = 28 * 28     # 784
HID_DIM = 256
OUT_DIM = 10

K_PAD = 896          # 7 * 128 : padded contraction dim for fc1
OUT_PAD = 128        # lane-dense padded output width for fc2


def _round_up(n, m):
    return (n + m - 1) // m * m


def _lif_step(z, v, i):
    """One step of norse.functional.lif_feed_forward_step (forward semantics, f32)."""
    dv = DT * TAU_MEM_INV * ((V_LEAK - v) + i)
    v_decayed = v + dv
    di = -DT * TAU_SYN_INV * i
    i_decayed = i + di
    # SuperSpike surrogate forward pass == heaviside(x > 0)
    spk = (v_decayed - V_TH > 0.0).astype(z.dtype)
    v_new = (1.0 - spk) * v_decayed + spk * V_RESET
    i_new = i_decayed + z
    return spk, v_new, i_new


def norsenet_kernel(x_ref, w1_ref, b1_ref, w2_ref, b2_ref, out_ref):
    x = x_ref[...]                                   # (TB, 896) bf16
    # fc1: bf16 operands, f32 accumulation on the MXU.
    z1 = jnp.dot(x, w1_ref[...], preferred_element_type=jnp.float32) + b1_ref[...]
    v0 = jnp.zeros_like(z1)
    i0 = jnp.zeros_like(z1)
    spk1, _, _ = _lif_step(z1, v0, i0)               # lif1 (default zero state), f32

    # fc2: spikes are {0, 1} so the bf16 cast is exact.
    z2 = jnp.dot(spk1.astype(jnp.bfloat16), w2_ref[...],
                 preferred_element_type=jnp.float32) + b2_ref[...]
    v0b = jnp.zeros_like(z2)
    i0b = jnp.zeros_like(z2)
    spk2, _, _ = _lif_step(z2, v0b, i0b)             # lif2 (default zero state)

    out_ref[...] = spk2.astype(out_ref.dtype)        # (TB, 128) lane-dense store


def norsenet_forward(x, w1, b1, w2, b2, *, batch_tile=256):
    """x: (B, 784) f32; w1: (784, 256); b1: (1, 256); w2: (256, 10); b2: (1, 10)."""
    B = x.shape[0]
    assert x.shape[1] == IN_DIM

    B_pad = _round_up(B, 8)
    tb = min(_round_up(batch_tile, 8), B_pad)        # one grid step for tiny batches
    B_pad = _round_up(B_pad, tb)
    num_tiles = B_pad // tb

    # Pad + cast matmul operands to bf16 (zero padding contributes nothing to the dot).
    x_p = jnp.zeros((B_pad, K_PAD), jnp.bfloat16).at[:B, :IN_DIM].set(
        x.astype(jnp.bfloat16))
    w1_p = jnp.zeros((K_PAD, HID_DIM), jnp.bfloat16).at[:IN_DIM, :].set(
        w1.astype(jnp.bfloat16))
    w2_p = jnp.zeros((HID_DIM, OUT_PAD), jnp.bfloat16).at[:, :OUT_DIM].set(
        w2.astype(jnp.bfloat16))
    b1_p = b1.reshape(1, HID_DIM).astype(jnp.float32)
    b2_p = jnp.zeros((1, OUT_PAD), jnp.float32).at[:, :OUT_DIM].set(
        b2.reshape(1, OUT_DIM).astype(jnp.float32))

    cost = pl.CostEstimate(
        flops=2 * B_pad * K_PAD * HID_DIM + 2 * B_pad * HID_DIM * OUT_PAD,
        transcendentals=0,
        bytes_accessed=(x_p.size * 2 + w1_p.size * 2 + w2_p.size * 2
                        + b1_p.size * 4 + b2_p.size * 4 + B_pad * OUT_PAD * 4),
    )

    out_padded = pl.pallas_call(
        norsenet_kernel,
        out_shape=jax.ShapeDtypeStruct((B_pad, OUT_PAD), jnp.float32),
        grid_spec=pltpu.PrefetchScalarGridSpec(
            num_scalar_prefetch=0,
            grid=(num_tiles,),
            in_specs=[
                pl.BlockSpec((tb, K_PAD), lambda i: (i, 0)),        # x tiles stream
                pl.BlockSpec((K_PAD, HID_DIM), lambda i: (0, 0)),   # w1 resident
                pl.BlockSpec((1, HID_DIM), lambda i: (0, 0)),       # b1 resident
                pl.BlockSpec((HID_DIM, OUT_PAD), lambda i: (0, 0)), # w2 resident
                pl.BlockSpec((1, OUT_PAD), lambda i: (0, 0)),       # b2 resident
            ],
            out_specs=pl.BlockSpec((tb, OUT_PAD), lambda i: (i, 0)),
        ),
        compiler_params=pltpu.CompilerParams(
            dimension_semantics=("parallel",),       # shard batch tiles across TCs
        ),
        cost_estimate=cost,
    )(x_p, w1_p, b1_p, w2_p, b2_p)

    return out_padded[:B, :OUT_DIM]


def _reference(x, w1, b1, w2, b2):
    """Pure-JAX reference mirroring the kernel math (bf16 operands, f32 accum)."""
    z1 = jnp.dot(x.astype(jnp.bfloat16), w1.astype(jnp.bfloat16),
                 preferred_element_type=jnp.float32) + b1
    spk1, _, _ = _lif_step(z1, jnp.zeros_like(z1), jnp.zeros_like(z1))
    z2 = jnp.dot(spk1.astype(jnp.bfloat16), w2.astype(jnp.bfloat16),
                 preferred_element_type=jnp.float32) + b2
    spk2, _, _ = _lif_step(z2, jnp.zeros_like(z2), jnp.zeros_like(z2))
    return spk2


if __name__ == "__main__":
    key = jax.random.PRNGKey(0)
    kx, kw1, kb1, kw2, kb2 = jax.random.split(key, 5)

    # Deterministic parameter init mimicking nn.Linear's U(-1/sqrt(fan_in), +1/sqrt(fan_in)).
    bound1 = 1.0 / jnp.sqrt(jnp.float32(IN_DIM))
    bound2 = 1.0 / jnp.sqrt(jnp.float32(HID_DIM))
    w1 = jax.random.uniform(kw1, (IN_DIM, HID_DIM), jnp.float32, -bound1, bound1)
    b1 = jax.random.uniform(kb1, (1, HID_DIM), jnp.float32, -bound1, bound1)
    w2 = jax.random.uniform(kw2, (HID_DIM, OUT_DIM), jnp.float32, -bound2, bound2)
    b2 = jax.random.uniform(kb2, (1, OUT_DIM), jnp.float32, -bound2, bound2)

    batch = 8
    x = jax.random.normal(kx, (batch, IN_DIM), jnp.float32)  # flattened 28x28 input

    # jit the wrapper so the host-side pad/cast, pallas_call, and final slice fuse
    # into one compiled program (no per-op dispatch between them).
    fwd = jax.jit(norsenet_forward)
    out = jax.block_until_ready(fwd(x, w1, b1, w2, b2))

    ref = _reference(x, w1, b1, w2, b2)
    assert out.shape == (batch, OUT_DIM)
    assert jnp.allclose(out, ref, atol=1e-5), "Pallas output mismatch vs JAX reference"

    print("KERNEL_OK")
</pallas_src>

<mosaic_0001>
module attributes {stable_mosaic.version = 11 : i64} {
  func.func @norsenet_kernel(%arg0: i32, %arg1: memref<8x896xbf16, #tpu.memory_space<vmem>>, %arg2: memref<896x256xbf16, #tpu.memory_space<vmem>>, %arg3: memref<1x256xf32, #tpu.memory_space<vmem>>, %arg4: memref<256x128xbf16, #tpu.memory_space<vmem>>, %arg5: memref<1x128xf32, #tpu.memory_space<vmem>>, %arg6: memref<8x128xf32, #tpu.memory_space<vmem>>) attributes {dimension_semantics = [#tpu.dimension_semantics<parallel>], iteration_bounds = array<i64: 1>, scalar_prefetch = 0 : i64, scratch_operands = 0 : i64, tpu.core_type = #tpu.core_type<tc>, window_params = [{transform_indices = @transform_0, window_bounds = array<i64: 8, 896>}, {pipeline_mode = #tpu.pipeline_mode<synchronous>, transform_indices = @transform_1, window_bounds = array<i64: 896, 256>}, {pipeline_mode = #tpu.pipeline_mode<synchronous>, transform_indices = @transform_2, window_bounds = array<i64: 1, 256>}, {pipeline_mode = #tpu.pipeline_mode<synchronous>, transform_indices = @transform_3, window_bounds = array<i64: 256, 128>}, {pipeline_mode = #tpu.pipeline_mode<synchronous>, transform_indices = @transform_4, window_bounds = array<i64: 1, 128>}, {transform_indices = @transform_5, window_bounds = array<i64: 8, 128>}]} {
    %cst = arith.constant 0.000000e+00 : f32
    %0 = vector.broadcast %cst : f32 to vector<8x128xf32>
    %cst_0 = arith.constant 0.000000e+00 : f32
    %1 = vector.broadcast %cst_0 : f32 to vector<8x128xf32>
    %cst_1 = arith.constant 0.000000e+00 : f32
    %2 = vector.broadcast %cst_1 : f32 to vector<8x128xf32>
    %3 = arith.subf %2, %0 : vector<8x128xf32>
    %4 = arith.addf %3, %1 : vector<8x128xf32>
    %cst_2 = arith.constant 1.000000e-01 : f32
    %5 = vector.broadcast %cst_2 : f32 to vector<8x128xf32>
    %6 = arith.mulf %5, %4 : vector<8x128xf32>
    %7 = arith.addf %0, %6 : vector<8x128xf32>
    %cst_3 = arith.constant 1.000000e+00 : f32
    %8 = vector.broadcast %cst_3 : f32 to vector<8x128xf32>
    %9 = arith.subf %7, %8 : vector<8x128xf32>
    %cst_4 = arith.constant 0.000000e+00 : f32
    %10 = vector.broadcast %cst_4 : f32 to vector<8x128xf32>
    %11 = arith.cmpf ogt, %9, %10 : vector<8x128xf32>
    %12 = arith.extui %11 : vector<8x128xi1> to vector<8x128xi32>
    %13 = arith.sitofp %12 : vector<8x128xi32> to vector<8x128xf32>
    %c0 = arith.constant 0 : index
    %c0_5 = arith.constant 0 : index
    %14 = vector.load %arg6[%c0, %c0_5] : memref<8x128xf32, #tpu.memory_space<vmem>>, vector<8x128xf32>
    tpu.vector_store %arg6[%c0, %c0_5], %13 {strides = array<i32>} : memref<8x128xf32, #tpu.memory_space<vmem>>, vector<8x128xf32>,
    return
  }
  func.func @transform_0(%arg0: i32) -> (i32, i32) {
    %c0_i32 = arith.constant 0 : i32
    %c0_i32_0 = arith.constant 0 : i32
    return %arg0, %c0_i32 : i32, i32
  }
  func.func @transform_1(%arg0: i32) -> (i32, i32) {
    %c0_i32 = arith.constant 0 : i32
    %c0_i32_0 = arith.constant 0 : i32
    %c0_i32_1 = arith.constant 0 : i32
    return %c0_i32, %c0_i32_0 : i32, i32
  }
  func.func @transform_2(%arg0: i32) -> (i32, i32) {
    %c0_i32 = arith.constant 0 : i32
    %c0_i32_0 = arith.constant 0 : i32
    %c0_i32_1 = arith.constant 0 : i32
    return %c0_i32, %c0_i32_0 : i32, i32
  }
  func.func @transform_3(%arg0: i32) -> (i32, i32) {
    %c0_i32 = arith.constant 0 : i32
    %c0_i32_0 = arith.constant 0 : i32
    %c0_i32_1 = arith.constant 0 : i32
    return %c0_i32, %c0_i32_0 : i32, i32
  }
  func.func @transform_4(%arg0: i32) -> (i32, i32) {
    %c0_i32 = arith.constant 0 : i32
    %c0_i32_0 = arith.constant 0 : i32
    %c0_i32_1 = arith.constant 0 : i32
    return %c0_i32, %c0_i32_0 : i32, i32
  }
  func.func @transform_5(%arg0: i32) -> (i32, i32) {
    %c0_i32 = arith.constant 0 : i32
    %c0_i32_0 = arith.constant 0 : i32
    return %arg0, %c0_i32 : i32, i32
  }
}

</mosaic_0001>

<llo_original>
// kernel: norsenet_forward.1
$region0: #{norsenet_forward.1}
  #allocation0 [shape = 'u32[]', space=smem, size = 0x4, offset = 0x4, fixed_abs, tag = 'smem constant byte address 0x4 - core index']
  #allocation1 [shape = 'u32[144,128]{1,0:T(1,128)}', space=vmem, size = 0x12000, scoped, tag = 'internal scratch']
  %s0 = inlined_call_operand.vmem [shape: bf16[8,896], index: 0, kind: input, shape index: {}]
  %s1 = inlined_call_operand.vmem [shape: bf16[896,256], index: 1, kind: input, shape index: {}]
  %s2 = inlined_call_operand.vmem [shape: f32[1,256], index: 2, kind: input, shape index: {}]
  %s3 = inlined_call_operand.vmem [shape: bf16[256,128], index: 3, kind: input, shape index: {}]
  %s4 = inlined_call_operand.vmem [shape: f32[1,128], index: 4, kind: input, shape index: {}]
  %s5 = inlined_call_operand.hbm [shape: f32[8,128], index: 5, kind: output, shape index: {}]
  %s6 = sld [smem:[#allocation0]]
  $region30: #{norsenet_forward.1} parent=0
    _
  %s8 = ssub.s32 1, %s6
  %s9 = scalar_select 0, %s8, %s6
  $region1: #{norsenet_forward.1} parent=0
    #allocation2 [shape = 'u8[4096]{0}', space=vmem, size = 0x1000, scoped, tag = 'output window, operand 0, single buffered']
    #allocation3 [shape = 's32[1]{0}', space=sflag, size = 0x4, scoped, tag = 'scoped memory for norsenet_forward.1']
    %10 = vsyncpa [#allocation3], 0
    // Predicated region
    $region2: #{norsenet_forward.1} parent=1 // pred_check
      _
    $region3: #{norsenet_forward.1} parent=1 // pred_check_branch
      %12 = sbr.rel (0) target = $region5
    $region4: #{norsenet_forward.1} parent=1 // pred_region
      _
    $region5: #{norsenet_forward.1} parent=1 // pred_fallthru
      _
    // Predicated region
    $region6: #{norsenet_forward.1} parent=1 // pred_check
      _
    $region7: #{norsenet_forward.1} parent=1 // pred_check_branch
      %14 = sbr.rel (0) target = $region9
    $region8: #{norsenet_forward.1} parent=1 // pred_region
      _
    $region9: #{norsenet_forward.1} parent=1 // pred_fallthru
      _
    // Predicated region
    $region10: #{norsenet_forward.1} parent=1 // pred_check
      _
    $region11: #{norsenet_forward.1} parent=1 // pred_check_branch
      %16 = sbr.rel (0) target = $region13
    $region12: #{norsenet_forward.1} parent=1 // pred_region
      _
    $region13: #{norsenet_forward.1} parent=1 // pred_fallthru
      _
    // Predicated region
    $region14: #{norsenet_forward.1} parent=1 // pred_check
      _
    $region15: #{norsenet_forward.1} parent=1 // pred_check_branch
      %18 = sbr.rel (0) target = $region17
    $region16: #{norsenet_forward.1} parent=1 // pred_region
      _
    $region17: #{norsenet_forward.1} parent=1 // pred_fallthru
      _
    // Predicated region
    $region18: #{norsenet_forward.1} parent=1 // pred_check
      _
    $region19: #{norsenet_forward.1} parent=1 // pred_check_branch
      %20 = sbr.rel (0) target = $region21
    $region20: #{norsenet_forward.1} parent=1 // pred_region
      _
    $region21: #{norsenet_forward.1} parent=1 // pred_fallthru
      _
    %vm21 = vcmp.gt.f32.partialorder -1.0, 0.0
    %v22 = vsel %vm21, 1, 0
    %v23 = vcvt.s32.f32 %v22
    %24 = vst [vmem:[#allocation2] sm:$0xff] %v23
    // Predicated region
    $region22: #{norsenet_forward.1} parent=1 // pred_check
      _
    $region23: #{norsenet_forward.1} parent=1 // pred_check_branch
      %26 = sbr.rel (0) target = $region25
    $region24: #{norsenet_forward.1} parent=1 // pred_region
      %s28 = ssub.s32 128, 128
      %29 = vsyncadd [#allocation3], %s28
      %s31 = sshll.u32 [#allocation2], 4
      %s32 = int_to_ptr.vmem [resolvable:$true] %s31
      %34 = dma.vmem_to_hbm [thread:$0]  %s32, 128, %s5, [#allocation3]
    $region25: #{norsenet_forward.1} parent=1 // pred_fallthru
      _
    // Predicated region
    $region26: #{norsenet_forward.1} parent=1 // pred_check
      _
    $region27: #{norsenet_forward.1} parent=1 // pred_check_branch
      %36 = sbr.rel (0) target = $region29
    $region28: #{norsenet_forward.1} parent=1 // pred_region
      %37 = dma.done [#allocation3], 128
    $region29: #{norsenet_forward.1} parent=1 // pred_fallthru
      _
    %38 = vsyncpa [#allocation3], 1

</llo_original>
